<compile_context>
chip_gen: v6e
topology: v6e:2x2x1
jax: 0.10.0
libtpu: 0.0.40
codegen_flags: <defaults>
</compile_context>

<pallas_src>
import functools

import jax
import jax.numpy as jnp
from jax import lax
from jax.experimental import pallas as pl
from jax.experimental.pallas import tpu as pltpu

LANE = 128
MAX_BLOCK_ROWS = 4096  # 4096*128*4B = 2 MiB per f32 buffer


def _complex_dropout_kernel(seed_ref, xr_ref, xi_ref, yr_ref, yi_ref, *,
                            block_rows, threshold, scale):
    shape = xr_ref.shape  # (block_rows, LANE)

    # Global flat element index for every element of this block (uint32, wraps
    # harmlessly for > 4G-element tensors).
    row0 = pl.program_id(0).astype(jnp.uint32) * jnp.uint32(block_rows)
    r = lax.broadcasted_iota(jnp.int32, shape, 0).astype(jnp.uint32)
    c = lax.broadcasted_iota(jnp.int32, shape, 1).astype(jnp.uint32)
    flat = (row0 + r) * jnp.uint32(LANE) + c

    seed_u = seed_ref[0].astype(jnp.uint32)

    def keep_mask(salt):
        # Stateless counter-based hash (lowbias32-style finalizer).  Distinct
        # salts give independent masks for the real / imaginary parts; the
        # stream depends only on (seed, element index), not on the tiling.
        h = flat ^ (seed_u * jnp.uint32(0x9E3779B1) + jnp.uint32(salt))
        h = h ^ (h >> 16)
        h = h * jnp.uint32(0x7FEB352D)
        h = h ^ (h >> 15)
        h = h * jnp.uint32(0x846CA68B)
        h = h ^ (h >> 16)
        # P(h >= threshold) = 1 - p  (threshold = round(p * 2^32), p < 1).
        return h >= jnp.uint32(threshold)

    def drop(x, salt):
        return jnp.where(keep_mask(salt),
                         x * jnp.asarray(scale, x.dtype),
                         jnp.zeros_like(x))

    yr_ref[...] = drop(xr_ref[...], 0x2545F491)
    yi_ref[...] = drop(xi_ref[...], 0x6C8E9CF5)


def complex_dropout(x_r, x_i, p=0.5, training=True, inplace=False, *, seed=0):
    """Pallas-TPU equivalent of (F.dropout(x_r, p, training), F.dropout(x_i, p, training))."""
    del inplace  # TODO(synk): in-place mutation has no JAX equivalent; functional output only.
    if (not training) or p == 0.0:
        return x_r, x_i
    if p >= 1.0:
        return jnp.zeros_like(x_r), jnp.zeros_like(x_i)

    assert x_r.shape == x_i.shape and x_r.dtype == x_i.dtype
    orig_shape = x_r.shape
    dtype = x_r.dtype
    total = int(x_r.size)

    rows = pl.cdiv(total, LANE)
    padded_total = rows * LANE
    needs_tail_pad = padded_total != total  # only when total % 128 != 0

    def to_2d(x):
        if needs_tail_pad:
            # Unavoidable copy only for the <128-element tail case.
            x = jnp.pad(x.reshape(-1), (0, padded_total - total))
            return x.reshape(rows, LANE)
        # Contiguous reshape: free, lane-dense layout with full sublanes.
        return x.reshape(rows, LANE)

    xr2, xi2 = to_2d(x_r), to_2d(x_i)

    # Block rows: full array dim for small tensors (divisibility rule waived),
    # otherwise 4096 (divisible by the min sublane tile for f32/bf16/int8).
    # Ragged last block (rows % block_rows != 0) is handled by Pallas boundary
    # masking — no wrapper pad / slice needed along the row axis.
    block_rows = rows if rows <= MAX_BLOCK_ROWS else MAX_BLOCK_ROWS
    grid = pl.cdiv(rows, block_rows)

    threshold = min(int(round(float(p) * (1 << 32))), (1 << 32) - 1)
    scale = 1.0 / (1.0 - float(p))
    kernel = functools.partial(_complex_dropout_kernel,
                               block_rows=block_rows,
                               threshold=threshold,
                               scale=scale)

    seed_arr = jnp.asarray([int(seed) % (1 << 31)], dtype=jnp.int32)

    # index_maps receive the scalar-prefetch ref as a trailing positional arg.
    tile = pl.BlockSpec((block_rows, LANE), lambda i, seed_ref: (i, 0))

    yr2, yi2 = pl.pallas_call(
        kernel,
        out_shape=(jax.ShapeDtypeStruct((rows, LANE), dtype),
                   jax.ShapeDtypeStruct((rows, LANE), dtype)),
        grid_spec=pltpu.PrefetchScalarGridSpec(
            num_scalar_prefetch=1,
            grid=(grid,),
            in_specs=[tile, tile],
            out_specs=(tile, tile),
        ),
        compiler_params=pltpu.CompilerParams(
            dimension_semantics=("parallel",),   # megacore-shardable on v7x
            vmem_limit_bytes=32 * 1024 * 1024,   # 16 MiB of buffers worst case
        ),
    )(seed_arr, xr2, xi2)

    def from_2d(y):
        if needs_tail_pad:
            return y.reshape(-1)[:total].reshape(orig_shape)
        return y.reshape(orig_shape)   # free reshape, no slice copy

    return from_2d(yr2), from_2d(yi2)


class ComplexDropout:
    """Mirror of the PyTorch module."""

    def __init__(self, p=0.5, inplace=False):
        self.p = p
        self.inplace = inplace

    def forward(self, input_r, input_i, *, seed=0):
        # Faithful to the reference code: it calls
        # complex_dropout(input_r, input_i, self.p, self.inplace), which binds
        # `self.inplace` to the `training` parameter — so with the default
        # inplace=False the module is an identity op.
        return complex_dropout(input_r, input_i, self.p, self.inplace, seed=seed)

    __call__ = forward


if __name__ == "__main__":
    key = jax.random.PRNGKey(0)
    k_r, k_i, k_r2, k_i2 = jax.random.split(key, 4)

    N, C, H, W = 2, 4, 16, 16
    x_r = jax.random.normal(k_r, (N, C, H, W), dtype=jnp.float32)
    x_i = jax.random.normal(k_i, (N, C, H, W), dtype=jnp.float32)

    # 1) Module path exactly as the PyTorch forward behaves with defaults
    #    (inplace=False is passed as `training` -> identity).
    mod = ComplexDropout(p=0.5)
    id_r, id_i = mod(x_r, x_i)
    jax.block_until_ready((id_r, id_i))
    assert bool(jnp.array_equal(id_r, x_r)) and bool(jnp.array_equal(id_i, x_i))

    # 2) Active dropout path (training=True) — exercises the Pallas kernel.
    p = 0.5
    y_r, y_i = complex_dropout(x_r, x_i, p=p, training=True, seed=1234)
    jax.block_until_ready((y_r, y_i))

    scale = 1.0 / (1.0 - p)

    def check(y, x, rate_check=True):
        assert y.shape == x.shape and y.dtype == x.dtype
        dropped = (y == 0.0)
        kept_ok = jnp.where(dropped, True, jnp.isclose(y, x * scale, rtol=1e-5, atol=1e-6))
        assert bool(jnp.all(kept_ok)), "kept elements must equal x / (1 - p)"
        if rate_check:
            rate = float(jnp.mean(dropped.astype(jnp.float32)))
            assert 0.3 < rate < 0.7, f"drop rate {rate} far from p={p}"

    check(y_r, x_r)
    check(y_i, x_i)
    # Real and imaginary masks are drawn independently (distinct hash salts).
    assert bool(jnp.any((y_r == 0.0) != (y_i == 0.0)))

    # 3) Ragged shape (total not a multiple of 128) — exercises the tail path.
    a_r = jax.random.normal(k_r2, (3, 5, 7), dtype=jnp.float32)
    a_i = jax.random.normal(k_i2, (3, 5, 7), dtype=jnp.float32)
    b_r, b_i = complex_dropout(a_r, a_i, p=p, training=True, seed=7)
    jax.block_until_ready((b_r, b_i))
    check(b_r, a_r, rate_check=False)
    check(b_i, a_i, rate_check=False)

    print("KERNEL_OK")
</pallas_src>

<mosaic_0001>
module attributes {stable_mosaic.version = 11 : i64} {
  func.func @_complex_dropout_kernel(%arg0: i32, %arg1: memref<1xi32, #tpu.memory_space<smem>>, %arg2: memref<16x128xf32, #tpu.memory_space<vmem>>, %arg3: memref<16x128xf32, #tpu.memory_space<vmem>>, %arg4: memref<16x128xf32, #tpu.memory_space<vmem>>, %arg5: memref<16x128xf32, #tpu.memory_space<vmem>>) attributes {dimension_semantics = [#tpu.dimension_semantics<parallel>], iteration_bounds = array<i64: 1>, scalar_prefetch = 1 : i64, scratch_operands = 0 : i64, tpu.core_type = #tpu.core_type<tc>, window_params = [{transform_indices = @transform_0, window_bounds = array<i64: 16, 128>}, {transform_indices = @transform_1, window_bounds = array<i64: 16, 128>}, {transform_indices = @transform_2, window_bounds = array<i64: 16, 128>}, {transform_indices = @transform_3, window_bounds = array<i64: 16, 128>}]} {
    %c16_i32 = arith.constant 16 : i32
    %0 = arith.muli %arg0, %c16_i32 : i32
    %1 = tpu.iota {dimensions = array<i32: 0>} : vector<16x128xi32>
    %2 = tpu.iota {dimensions = array<i32: 1>} : vector<16x128xi32>
    %3 = vector.broadcast %0 : i32 to vector<16x128xi32>
    %4 = arith.addi %3, %1 : vector<16x128xi32>
    %c128_i32 = arith.constant 128 : i32
    %5 = vector.broadcast %c128_i32 : i32 to vector<16x128xi32>
    %6 = arith.muli %4, %5 : vector<16x128xi32>
    %7 = arith.addi %6, %2 : vector<16x128xi32>
    %c0 = arith.constant 0 : index
    %8 = memref.load %arg1[%c0] : memref<1xi32, #tpu.memory_space<smem>>
    %c0_0 = arith.constant 0 : index
    %c0_1 = arith.constant 0 : index
    %9 = vector.load %arg2[%c0_0, %c0_1] : memref<16x128xf32, #tpu.memory_space<vmem>>, vector<16x128xf32>
    %c-1640531535_i32 = arith.constant -1640531535 : i32
    %10 = arith.muli %8, %c-1640531535_i32 : i32
    %c625341585_i32 = arith.constant 625341585 : i32
    %11 = arith.addi %10, %c625341585_i32 : i32
    %12 = vector.broadcast %11 : i32 to vector<16x128xi32>
    %13 = arith.xori %7, %12 : vector<16x128xi32>
    %c16_i32_2 = arith.constant 16 : i32
    %14 = vector.broadcast %c16_i32_2 : i32 to vector<16x128xi32>
    %15 = arith.shrui %13, %14 : vector<16x128xi32>
    %16 = arith.xori %13, %15 : vector<16x128xi32>
    %c2146121005_i32 = arith.constant 2146121005 : i32
    %17 = vector.broadcast %c2146121005_i32 : i32 to vector<16x128xi32>
    %18 = arith.muli %16, %17 : vector<16x128xi32>
    %c15_i32 = arith.constant 15 : i32
    %19 = vector.broadcast %c15_i32 : i32 to vector<16x128xi32>
    %20 = arith.shrui %18, %19 : vector<16x128xi32>
    %21 = arith.xori %18, %20 : vector<16x128xi32>
    %c-2073254261_i32 = arith.constant -2073254261 : i32
    %22 = vector.broadcast %c-2073254261_i32 : i32 to vector<16x128xi32>
    %23 = arith.muli %21, %22 : vector<16x128xi32>
    %c16_i32_3 = arith.constant 16 : i32
    %24 = vector.broadcast %c16_i32_3 : i32 to vector<16x128xi32>
    %25 = arith.shrui %23, %24 : vector<16x128xi32>
    %26 = arith.xori %23, %25 : vector<16x128xi32>
    %c-2147483648_i32 = arith.constant -2147483648 : i32
    %27 = vector.broadcast %c-2147483648_i32 : i32 to vector<16x128xi32>
    %28 = arith.cmpi uge, %26, %27 : vector<16x128xi32>
    %cst = arith.constant 2.000000e+00 : f32
    %29 = vector.broadcast %cst : f32 to vector<16x128xf32>
    %30 = arith.mulf %9, %29 : vector<16x128xf32>
    %cst_4 = arith.constant 0.000000e+00 : f32
    %31 = vector.broadcast %cst_4 : f32 to vector<16x128xf32>
    %32 = arith.select %28, %30, %31 : vector<16x128xi1>, vector<16x128xf32>
    %c0_5 = arith.constant 0 : index
    %c0_6 = arith.constant 0 : index
    %33 = vector.load %arg4[%c0_5, %c0_6] : memref<16x128xf32, #tpu.memory_space<vmem>>, vector<16x128xf32>
    tpu.vector_store %arg4[%c0_5, %c0_6], %32 {strides = array<i32>} : memref<16x128xf32, #tpu.memory_space<vmem>>, vector<16x128xf32>,
    %c0_7 = arith.constant 0 : index
    %c0_8 = arith.constant 0 : index
    %34 = vector.load %arg3[%c0_7, %c0_8] : memref<16x128xf32, #tpu.memory_space<vmem>>, vector<16x128xf32>
    %c-1640531535_i32_9 = arith.constant -1640531535 : i32
    %35 = arith.muli %8, %c-1640531535_i32_9 : i32
    %c1821285621_i32 = arith.constant 1821285621 : i32
    %36 = arith.addi %35, %c1821285621_i32 : i32
    %37 = vector.broadcast %36 : i32 to vector<16x128xi32>
    %38 = arith.xori %7, %37 : vector<16x128xi32>
    %c16_i32_10 = arith.constant 16 : i32
    %39 = vector.broadcast %c16_i32_10 : i32 to vector<16x128xi32>
    %40 = arith.shrui %38, %39 : vector<16x128xi32>
    %41 = arith.xori %38, %40 : vector<16x128xi32>
    %c2146121005_i32_11 = arith.constant 2146121005 : i32
    %42 = vector.broadcast %c2146121005_i32_11 : i32 to vector<16x128xi32>
    %43 = arith.muli %41, %42 : vector<16x128xi32>
    %c15_i32_12 = arith.constant 15 : i32
    %44 = vector.broadcast %c15_i32_12 : i32 to vector<16x128xi32>
    %45 = arith.shrui %43, %44 : vector<16x128xi32>
    %46 = arith.xori %43, %45 : vector<16x128xi32>
    %c-2073254261_i32_13 = arith.constant -2073254261 : i32
    %47 = vector.broadcast %c-2073254261_i32_13 : i32 to vector<16x128xi32>
    %48 = arith.muli %46, %47 : vector<16x128xi32>
    %c16_i32_14 = arith.constant 16 : i32
    %49 = vector.broadcast %c16_i32_14 : i32 to vector<16x128xi32>
    %50 = arith.shrui %48, %49 : vector<16x128xi32>
    %51 = arith.xori %48, %50 : vector<16x128xi32>
    %c-2147483648_i32_15 = arith.constant -2147483648 : i32
    %52 = vector.broadcast %c-2147483648_i32_15 : i32 to vector<16x128xi32>
    %53 = arith.cmpi uge, %51, %52 : vector<16x128xi32>
    %cst_16 = arith.constant 2.000000e+00 : f32
    %54 = vector.broadcast %cst_16 : f32 to vector<16x128xf32>
    %55 = arith.mulf %34, %54 : vector<16x128xf32>
    %cst_17 = arith.constant 0.000000e+00 : f32
    %56 = vector.broadcast %cst_17 : f32 to vector<16x128xf32>
    %57 = arith.select %53, %55, %56 : vector<16x128xi1>, vector<16x128xf32>
    %c0_18 = arith.constant 0 : index
    %c0_19 = arith.constant 0 : index
    %58 = vector.load %arg5[%c0_18, %c0_19] : memref<16x128xf32, #tpu.memory_space<vmem>>, vector<16x128xf32>
    tpu.vector_store %arg5[%c0_18, %c0_19], %57 {strides = array<i32>} : memref<16x128xf32, #tpu.memory_space<vmem>>, vector<16x128xf32>,
    return
  }
  func.func @transform_0(%arg0: i32, %arg1: memref<1xi32, #tpu.memory_space<smem>>) -> (i32, i32) {
    %c0_i32 = arith.constant 0 : i32
    %c0_i32_0 = arith.constant 0 : i32
    return %arg0, %c0_i32 : i32, i32
  }
  func.func @transform_1(%arg0: i32, %arg1: memref<1xi32, #tpu.memory_space<smem>>) -> (i32, i32) {
    %c0_i32 = arith.constant 0 : i32
    %c0_i32_0 = arith.constant 0 : i32
    return %arg0, %c0_i32 : i32, i32
  }
  func.func @transform_2(%arg0: i32, %arg1: memref<1xi32, #tpu.memory_space<smem>>) -> (i32, i32) {
    %c0_i32 = arith.constant 0 : i32
    %c0_i32_0 = arith.constant 0 : i32
    return %arg0, %c0_i32 : i32, i32
  }
  func.func @transform_3(%arg0: i32, %arg1: memref<1xi32, #tpu.memory_space<smem>>) -> (i32, i32) {
    %c0_i32 = arith.constant 0 : i32
    %c0_i32_0 = arith.constant 0 : i32
    return %arg0, %c0_i32 : i32, i32
  }
}

</mosaic_0001>

<llo_original>
// kernel: tpu_custom_call.1
$region0: #{tpu_custom_call.1}
  #allocation0 [shape = 'u32[]', space=smem, size = 0x4, offset = 0x4, fixed_abs, tag = 'smem constant byte address 0x4 - core index']
  #allocation1 [shape = 'u32[144,128]{1,0:T(1,128)}', space=vmem, size = 0x12000, scoped, tag = 'internal scratch']
  #allocation2 [shape = 's32[1]{0}', space=sflag, size = 0x4, scoped, tag = 'scoped memory for tpu_custom_call.1']
  #allocation3 [shape = 's32[1]{0:T(128)S(6)}', space=smem, size = 0x200, scoped, tag = 'prefetched SMEM operand 0']
  %s0 = inlined_call_operand.<no memory space> [shape: s32[1], index: 0, kind: input, shape index: {}]
  %s1 = inlined_call_operand.hbm [shape: f32[16,128], index: 1, kind: input, shape index: {}]
  %s2 = inlined_call_operand.hbm [shape: f32[16,128], index: 2, kind: input, shape index: {}]
  %s3 = inlined_call_operand.hbm [shape: f32[16,128], index: 3, kind: output, shape index: {0}]
  %s4 = inlined_call_operand.hbm [shape: f32[16,128], index: 4, kind: output, shape index: {1}]
  %5 = xla_tuple %s3, %s4
  %s6 = sld [smem:[#allocation0]]
  $region34: #{tpu_custom_call.1} parent=0
    _
  %s8 = ssub.s32 1, %s6
  %s9 = scalar_select 0, %s8, %s6
  %10 = sst [smem:[#allocation3]] %s0
  $region1: #{tpu_custom_call.1} parent=0
    #allocation4 [shape = 'u8[8192]{0}', space=vmem, size = 0x2000, scoped, tag = 'input window, operand 1, single buffered']
    #allocation5 [shape = 's32[1]{0}', space=sflag, size = 0x4, scoped, tag = 'scoped memory for tpu_custom_call.1']
    #allocation6 [shape = 's32[1]{0}', space=sflag, size = 0x4, scoped, tag = 'scoped memory for tpu_custom_call.1']
    #allocation7 [shape = 'u8[8192]{0}', space=vmem, size = 0x2000, scoped, tag = 'input window, operand 2, single buffered']
    #allocation8 [shape = 's32[1]{0}', space=sflag, size = 0x4, scoped, tag = 'scoped memory for tpu_custom_call.1']
    #allocation9 [shape = 'u8[8192]{0}', space=vmem, size = 0x2000, scoped, tag = 'output window, operand 0, single buffered']
    #allocation10 [shape = 'u8[8192]{0}', space=vmem, size = 0x2000, scoped, tag = 'output window, operand 1, single buffered']
    #allocation11 [shape = 's32[1]{0}', space=sflag, size = 0x4, scoped, tag = 'scoped memory for tpu_custom_call.1']
    %11 = vsyncpa [#allocation5], 0
    %12 = vsyncpa [#allocation8], 0
    %13 = vsyncpa [#allocation6], 0
    %14 = vsyncpa [#allocation11], 0
    // Predicated region
    $region2: #{tpu_custom_call.1} parent=1 // pred_check
      _
    $region3: #{tpu_custom_call.1} parent=1 // pred_check_branch
      %16 = sbr.rel (0) target = $region5
    $region4: #{tpu_custom_call.1} parent=1 // pred_region
      %s18 = ssub.s32 256, 256
      %19 = vsyncadd [#allocation5], %s18
      %s20 = sshll.u32 [#allocation4], 4
      %s21 = int_to_ptr.vmem [resolvable:$true] %s20
      %26 = dma.hbm_to_vmem [thread:$0]  %s1, 256, %s21, [#allocation5], 128, 128, 8
    $region5: #{tpu_custom_call.1} parent=1 // pred_fallthru
      _
    // Predicated region
    $region6: #{tpu_custom_call.1} parent=1 // pred_check
      _
    $region7: #{tpu_custom_call.1} parent=1 // pred_check_branch
      %28 = sbr.rel (0) target = $region9
    $region8: #{tpu_custom_call.1} parent=1 // pred_region
      %s30 = ssub.s32 256, 256
      %31 = vsyncadd [#allocation8], %s30
      %s32 = sshll.u32 [#allocation7], 4
      %s33 = int_to_ptr.vmem [resolvable:$true] %s32
      %38 = dma.hbm_to_vmem [thread:$0]  %s2, 256, %s33, [#allocation8], 128, 128, 8
    $region9: #{tpu_custom_call.1} parent=1 // pred_fallthru
      _
    // Predicated region
    $region10: #{tpu_custom_call.1} parent=1 // pred_check
      _
    $region11: #{tpu_custom_call.1} parent=1 // pred_check_branch
      %40 = sbr.rel (0) target = $region13
    $region12: #{tpu_custom_call.1} parent=1 // pred_region
      %41 = dma.done [#allocation5], 256
    $region13: #{tpu_custom_call.1} parent=1 // pred_fallthru
      _
    // Predicated region
    $region14: #{tpu_custom_call.1} parent=1 // pred_check
      _
    $region15: #{tpu_custom_call.1} parent=1 // pred_check_branch
      %43 = sbr.rel (0) target = $region17
    $region16: #{tpu_custom_call.1} parent=1 // pred_region
      %44 = dma.done [#allocation8], 256
    $region17: #{tpu_custom_call.1} parent=1 // pred_fallthru
      _
    %s45 = smul.u32 0, 16
    %v46 = vlaneseq
    %v47 = vshrl.u32 %v46, 7
    %v48 = vadd.s32 %v47, 8
    %v49 = vlaneseq
    %v50 = vand.u32 %v49, 127
    %v51 = vstv %s45
    %v52 = vadd.s32 %v51, %v47
    %v53 = vadd.s32 %v51, %v48
    %v54 = vmul.u32 %v52, 128
    %v55 = vmul.u32 %v53, 128
    %v56 = vadd.s32 %v54, %v50
    %v57 = vadd.s32 %v55, %v50
    %s58 = sld [smem:[#allocation3]]
    %v59 = vld [vmem:[#allocation4] sm:$0xff]
    %v60 = vld [vmem:[#allocation4 + $0x8] sm:$0xff]
    %s61 = smul.u32 %s58, 2654435761
    %s62 = sadd.s32 %s61, 625341585
    %v63 = vstv %s62
    %v64 = vxor.u32 %v56, %v63
    %v65 = vxor.u32 %v57, %v63
    %v66 = vshrl.u32 %v64, 16
    %v67 = vshrl.u32 %v65, 16
    %v68 = vxor.u32 %v64, %v66
    %v69 = vxor.u32 %v65, %v67
    %v70 = vmul.u32 %v68, 2146121005
    %v71 = vmul.u32 %v69, 2146121005
    %v72 = vshrl.u32 %v70, 15
    %v73 = vshrl.u32 %v71, 15
    %v74 = vxor.u32 %v70, %v72
    %v75 = vxor.u32 %v71, %v73
    %v76 = vmul.u32 %v74, 2221713035
    %v77 = vmul.u32 %v75, 2221713035
    %v78 = vshrl.u32 %v76, 16
    %v79 = vshrl.u32 %v77, 16
    %v80 = vxor.u32 %v76, %v78
    %v81 = vxor.u32 %v77, %v79
    %vm82 = vcmp.ge.u32.totalorder %v80, 2147483648
    %vm83 = vcmp.ge.u32.totalorder %v81, 2147483648
    %v84 = vmul.f32 %v59, 2.0
    %v85 = vmul.f32 %v60, 2.0
    %v86 = vsel %vm82, %v84, 0.0
    %v87 = vsel %vm83, %v85, 0.0
    %88 = vst [vmem:[#allocation9] sm:$0xff] %v86
    %89 = vst [vmem:[#allocation9 + $0x8] sm:$0xff] %v87
    %v90 = vld [vmem:[#allocation7] sm:$0xff]
    %v91 = vld [vmem:[#allocation7 + $0x8] sm:$0xff]
    %s92 = sadd.s32 %s61, 1821285621
    %v93 = vstv %s92
    %v94 = vxor.u32 %v56, %v93
    %v95 = vxor.u32 %v57, %v93
    %v96 = vshrl.u32 %v94, 16
    %v97 = vshrl.u32 %v95, 16
    %v98 = vxor.u32 %v94, %v96
    %v99 = vxor.u32 %v95, %v97
    %v100 = vmul.u32 %v98, 2146121005
    %v101 = vmul.u32 %v99, 2146121005
    %v102 = vshrl.u32 %v100, 15
    %v103 = vshrl.u32 %v101, 15
    %v104 = vxor.u32 %v100, %v102
    %v105 = vxor.u32 %v101, %v103
    %v106 = vmul.u32 %v104, 2221713035
    %v107 = vmul.u32 %v105, 2221713035
    %v108 = vshrl.u32 %v106, 16
    %v109 = vshrl.u32 %v107, 16
    %v110 = vxor.u32 %v106, %v108
    %v111 = vxor.u32 %v107, %v109
    %vm112 = vcmp.ge.u32.totalorder %v110, 2147483648
    %vm113 = vcmp.ge.u32.totalorder %v111, 2147483648
    %v114 = vmul.f32 %v90, 2.0
    %v115 = vmul.f32 %v91, 2.0
    %v116 = vsel %vm112, %v114, 0.0
    %v117 = vsel %vm113, %v115, 0.0
    %118 = vst [vmem:[#allocation10] sm:$0xff] %v116
    %119 = vst [vmem:[#allocation10 + $0x8] sm:$0xff] %v117
    // Predicated region
    $region18: #{tpu_custom_call.1} parent=1 // pred_check
      _
    $region19: #{tpu_custom_call.1} parent=1 // pred_check_branch
      %121 = sbr.rel (0) target = $region21
    $region20: #{tpu_custom_call.1} parent=1 // pred_region
      %s123 = ssub.s32 256, 256
      %124 = vsyncadd [#allocation6], %s123
      %s125 = sshll.u32 [#allocation9], 4
      %s126 = int_to_ptr.vmem [resolvable:$true] %s125
      %131 = dma.vmem_to_hbm [thread:$0]  %s126, 256, %s3, [#allocation6], 128, 128, 8
    $region21: #{tpu_custom_call.1} parent=1 // pred_fallthru
      _
    // Predicated region
    $region22: #{tpu_custom_call.1} parent=1 // pred_check
      _
    $region23: #{tpu_custom_call.1} parent=1 // pred_check_branch
      %133 = sbr.rel (0) target = $region25
    $region24: #{tpu_custom_call.1} parent=1 // pred_region
      %s135 = ssub.s32 256, 256
      %136 = vsyncadd [#allocation11], %s135
      %s137 = sshll.u32 [#allocation10], 4
      %s138 = int_to_ptr.vmem [resolvable:$true] %s137
      %143 = dma.vmem_to_hbm [thread:$0]  %s138, 256, %s4, [#allocation11], 128, 128, 8
    $region25: #{tpu_custom_call.1} parent=1 // pred_fallthru
      _
    // Predicated region
    $region26: #{tpu_custom_call.1} parent=1 // pred_check
      _
    $region27: #{tpu_custom_call.1} parent=1 // pred_check_branch
      %145 = sbr.rel (0) target = $region29
    $region28: #{tpu_custom_call.1} parent=1 // pred_region
      %146 = dma.done [#allocation6], 256
    $region29: #{tpu_custom_call.1} parent=1 // pred_fallthru
      _
    // Predicated region
    $region30: #{tpu_custom_call.1} parent=1 // pred_check
      _
    $region31: #{tpu_custom_call.1} parent=1 // pred_check_branch
      %148 = sbr.rel (0) target = $region33
    $region32: #{tpu_custom_call.1} parent=1 // pred_region
      %149 = dma.done [#allocation11], 256
    $region33: #{tpu_custom_call.1} parent=1 // pred_fallthru
      _
    %150 = vsyncpa [#allocation5], 1
    %151 = vsyncpa [#allocation8], 1
    %152 = vsyncpa [#allocation6], 1
    %153 = vsyncpa [#allocation11], 1

</llo_original>
